<compile_context>
chip_gen: v7x
topology: tpu7x:2x2x1
jax: 0.10.0
libtpu: 0.0.40
codegen_flags: <defaults>
</compile_context>

<pallas_src>
import jax
import jax.numpy as jnp
from jax import lax
from jax.experimental import pallas as pl
from jax.experimental.pallas import tpu as pltpu


def _fused_conv_eca_kernel(p_ref, w_ref, b_ref, eca_t_ref, eca_b_ref, o_ref, sum_ref):
    """One (sample n, hw-tile t) step of fused Conv2d+ReLU+ECAttention.

    p_ref     : VMEM (1, KKI, THW) bf16 im2col patches for this hw-tile (HW on lanes)
    w_ref     : VMEM (O, KKI)      bf16 conv weights (constant across grid)
    b_ref     : VMEM (O, 1)        f32  conv bias (column, broadcasts over lanes)
    eca_t_ref : VMEM (O, O)        f32  transposed banded matrix of Conv1d(1,1,3,pad=1)
    eca_b_ref : VMEM (1, 1)        f32  Conv1d bias
    o_ref     : VMEM (1, O, HW)    f32  per-sample output block (resident over t)
    sum_ref   : VMEM (O, 1)        f32  per-sample per-channel spatial sum
    """
    t = pl.program_id(1)
    nt = pl.num_programs(1)
    thw = p_ref.shape[2]
    o = o_ref.shape[1]
    hw = o_ref.shape[2]

    @pl.when(t == 0)
    def _init():
        sum_ref[...] = jnp.zeros_like(sum_ref)

    # Conv as (O, KKI) @ (KKI, THW) on the MXU (bf16 x bf16 -> f32) + bias + ReLU.
    y = jnp.dot(w_ref[...], p_ref[0], preferred_element_type=jnp.float32)   # (O, THW)
    y = jnp.maximum(y + b_ref[...], 0.0)

    # Per-channel spatial partial sums (AdaptiveAvgPool2d numerator): lane reduce.
    sum_ref[...] += jnp.sum(y, axis=1, keepdims=True)                       # (O, 1)

    # Stage into the per-sample VMEM-resident output block (lane-dense store);
    # HBM write-back happens once per sample, after the gate below.
    off = pl.multiple_of(t * thw, thw)
    o_ref[0, :, pl.ds(off, thw)] = y

    @pl.when(t == nt - 1)
    def _finalize():
        m = sum_ref[...] * (1.0 / hw)                                        # (O, 1) spatial mean
        # Zero-padded 1-D conv over channels: pre[c] = sum_j band[c, j] * m[j].
        pre = jnp.sum(eca_t_ref[...] * m, axis=0, keepdims=True)             # (1, O)
        a_row = jax.nn.sigmoid(pre + eca_b_ref[...])                         # (1, O)
        # Lane -> sublane "transpose" of the O-vector via a masked lane reduce.
        row = lax.broadcasted_iota(jnp.int32, (o, o), 0)
        col = lax.broadcasted_iota(jnp.int32, (o, o), 1)
        a_col = jnp.sum(jnp.where(row == col, a_row, 0.0),
                        axis=1, keepdims=True)                               # (O, 1)
        # Gate the whole sample in place (per-sublane scalar broadcast on the VPU).
        o_ref[0] = o_ref[0] * a_col


def conv_att2d(x_nchw, w_conv, b_conv, w_eca, b_eca, K=3, P=1):
    N, I, H, W = x_nchw.shape
    O = w_conv.shape[0]
    HW = H * W
    KKI = K * K * I

    # ---- im2col glue: cast to bf16 FIRST so the big patches array is built in bf16 ----
    xb = x_nchw.astype(jnp.bfloat16)
    xp = jnp.pad(xb, ((0, 0), (0, 0), (P, P), (P, P)))
    taps = [xp[:, :, dy:dy + H, dx:dx + W] for dy in range(K) for dx in range(K)]
    # (N, KKI, HW): tap-major / channel-minor on the contraction dim, HW on lanes.
    patches = jnp.stack(taps, axis=1).reshape(N, KKI, HW)
    # TODO(synk): move patch construction into the kernel (halo DMA of NCHW row-tiles
    # via memory_space=pl.ANY + make_async_copy) to kill the 9x im2col HBM blow-up.

    # PyTorch weight (O, I, K, K) -> (O, (dy, dx, c)) matching the patch tap order.
    w_mat = jnp.transpose(w_conv, (0, 2, 3, 1)).reshape(O, KKI).astype(jnp.bfloat16)
    b_col = b_conv.reshape(O, 1).astype(jnp.float32)

    # ECA Conv1d(1,1,3,pad=1) over channels as a banded (O, O) matrix (zero padding
    # handled by the missing corner entries); passed transposed for in-kernel use.
    band = (w_eca[0] * jnp.eye(O, k=-1) + w_eca[1] * jnp.eye(O)
            + w_eca[2] * jnp.eye(O, k=1)).astype(jnp.float32)
    eca_t = band.T
    eca_b = b_eca.reshape(1, 1).astype(jnp.float32)

    # HW tiling: per-sample output stays resident in VMEM, patches are tiled over hw.
    thw = HW
    for cand in (8192, 4096, 2048, 1024, 512, 256, 128):
        if HW % cand == 0:
            thw = cand
            break
    n_hw_tiles = HW // thw

    # VMEM budget: double-buffered resident output block + double-buffered patch tile.
    vmem_need = (2 * HW * O * 4) + (2 * thw * KKI * 2) + KKI * O * 2 + (O + O * O + 1) * 4
    vmem_limit = int(min(64 * 1024 * 1024, max(32 * 1024 * 1024, 2 * vmem_need)))
    # TODO(synk): for very large H*W on v7x (64 MiB VMEM/TC) keep the resident block in
    # bf16 or fall back to a two-pass variant (channel-sum side output + in-place gate
    # pass with input_output_aliases) instead of growing the limit further.

    out = pl.pallas_call(
        _fused_conv_eca_kernel,
        out_shape=jax.ShapeDtypeStruct((N, O, HW), jnp.float32),
        grid=(N, n_hw_tiles),
        in_specs=[
            pl.BlockSpec((1, KKI, thw), lambda n, t: (n, 0, t)),   # patches
            pl.BlockSpec((O, KKI), lambda n, t: (0, 0)),           # conv weights
            pl.BlockSpec((O, 1), lambda n, t: (0, 0)),             # conv bias (column)
            pl.BlockSpec((O, O), lambda n, t: (0, 0)),             # ECA band matrix^T
            pl.BlockSpec((1, 1), lambda n, t: (0, 0)),             # ECA bias
        ],
        out_specs=pl.BlockSpec((1, O, HW), lambda n, t: (n, 0, 0)),
        scratch_shapes=[pltpu.VMEM((O, 1), jnp.float32)],
        compiler_params=pltpu.CompilerParams(
            # N "parallel" shards samples across v7x's two TensorCores (N >= 2 here);
            # hw axis is the residency/accumulation axis -> "arbitrary".
            dimension_semantics=("parallel", "arbitrary"),
            vmem_limit_bytes=vmem_limit,
        ),
    )(patches, w_mat, b_col, eca_t, eca_b)

    # (N, O, HW) is already channel-major: free reshape back to the public NCHW layout.
    return out.reshape(N, O, H, W)


def reference(x, w_conv, b_conv, w_eca, b_eca):
    """Pure-JAX (f32) reference mirroring the PyTorch forward."""
    y = lax.conv_general_dilated(x, w_conv, (1, 1), ((1, 1), (1, 1)),
                                 dimension_numbers=('NCHW', 'OIHW', 'NCHW'))
    y = jnp.maximum(y + b_conv.reshape(1, -1, 1, 1), 0.0)
    m = jnp.mean(y, axis=(2, 3))                                # (N, O)
    mp = jnp.pad(m, ((0, 0), (1, 1)))
    a = w_eca[0] * mp[:, :-2] + w_eca[1] * mp[:, 1:-1] + w_eca[2] * mp[:, 2:] + b_eca
    a = jax.nn.sigmoid(a)
    return y * a[:, :, None, None]


if __name__ == "__main__":
    key = jax.random.PRNGKey(0)
    N, I, O, H, W, K = 2, 4, 8, 16, 16, 3
    k1, k2, k3, k4, k5 = jax.random.split(key, 5)

    x = jax.random.normal(k1, (N, I, H, W), jnp.float32)

    # deterministic parameter init (shapes from the module's __init__)
    fan_in = I * K * K
    w_conv = jax.random.normal(k2, (O, I, K, K), jnp.float32) * jnp.sqrt(2.0 / fan_in)
    b_conv = jax.random.uniform(k3, (O,), jnp.float32, -1.0, 1.0) / jnp.sqrt(fan_in)
    w_eca = jax.random.normal(k4, (3,), jnp.float32) * jnp.sqrt(1.0 / 3.0)
    b_eca = jax.random.uniform(k5, (1,), jnp.float32, -1.0, 1.0) * jnp.sqrt(1.0 / 3.0)

    out = jax.block_until_ready(conv_att2d(x, w_conv, b_conv, w_eca, b_eca))
    ref = reference(x, w_conv, b_conv, w_eca, b_eca)

    assert out.shape == (N, O, H, W)
    # bf16 matmul operands (f32 accumulation) -> compare at bf16-level tolerance.
    assert jnp.allclose(out, ref, atol=5e-2, rtol=5e-2), float(jnp.max(jnp.abs(out - ref)))
    print("KERNEL_OK")
</pallas_src>

<mosaic_0001>
module attributes {stable_mosaic.version = 11 : i64} {
  func.func @_fused_conv_eca_kernel(%arg0: i32, %arg1: i32, %arg2: memref<1x36x256xbf16, #tpu.memory_space<vmem>>, %arg3: memref<8x36xbf16, #tpu.memory_space<vmem>>, %arg4: memref<8x1xf32, #tpu.memory_space<vmem>>, %arg5: memref<8x8xf32, #tpu.memory_space<vmem>>, %arg6: memref<1x1xf32, #tpu.memory_space<vmem>>, %arg7: memref<1x8x256xf32, #tpu.memory_space<vmem>>, %arg8: memref<8x1xf32, #tpu.memory_space<vmem>>) attributes {dimension_semantics = [#tpu.dimension_semantics<parallel>, #tpu.dimension_semantics<arbitrary>], iteration_bounds = array<i64: 2, 1>, scalar_prefetch = 0 : i64, scratch_operands = 1 : i64, tpu.core_type = #tpu.core_type<tc>, window_params = [{transform_indices = @transform_0, window_bounds = array<i64: 1, 36, 256>}, {pipeline_mode = #tpu.pipeline_mode<synchronous>, transform_indices = @transform_1, window_bounds = array<i64: 8, 36>}, {pipeline_mode = #tpu.pipeline_mode<synchronous>, transform_indices = @transform_2, window_bounds = array<i64: 8, 1>}, {pipeline_mode = #tpu.pipeline_mode<synchronous>, transform_indices = @transform_3, window_bounds = array<i64: 8, 8>}, {pipeline_mode = #tpu.pipeline_mode<synchronous>, transform_indices = @transform_4, window_bounds = array<i64: 1, 1>}, {transform_indices = @transform_5, window_bounds = array<i64: 1, 8, 256>}]} {
    %c0_i32 = arith.constant 0 : i32
    %0 = arith.cmpi eq, %arg1, %c0_i32 : i32
    %1 = arith.extui %0 : i1 to i32
    %c0_i32_0 = arith.constant 0 : i32
    %2 = arith.cmpi ne, %1, %c0_i32_0 : i32
    scf.if %2 {
      %cst_17 = arith.constant 0.000000e+00 : f32
      %26 = vector.broadcast %cst_17 : f32 to vector<8x1xf32>
      %c0_18 = arith.constant 0 : index
      %c0_19 = arith.constant 0 : index
      %27 = vector.load %arg8[%c0_18, %c0_19] : memref<8x1xf32, #tpu.memory_space<vmem>>, vector<8x1xf32>
      tpu.vector_store %arg8[%c0_18, %c0_19], %26 {strides = array<i32>} : memref<8x1xf32, #tpu.memory_space<vmem>>, vector<8x1xf32>,
    } else {
    }
    %c0 = arith.constant 0 : index
    %c0_1 = arith.constant 0 : index
    %3 = vector.load %arg3[%c0, %c0_1] : memref<8x36xbf16, #tpu.memory_space<vmem>>, vector<8x36xbf16>
    %c0_2 = arith.constant 0 : index
    %c0_3 = arith.constant 0 : index
    %c0_4 = arith.constant 0 : index
    %4 = vector.load %arg2[%c0_2, %c0_3, %c0_4] : memref<1x36x256xbf16, #tpu.memory_space<vmem>>, vector<1x36x256xbf16>
    %5 = vector.shape_cast %4 : vector<1x36x256xbf16> to vector<36x256xbf16>
    %cst = arith.constant dense<0.000000e+00> : vector<8x256xf32>
    %6 = tpu.matmul %3, %5, %cst {dimension_numbers = #tpu.dot_dimension_numbers<[1], [0], [0], [1], [0, 0, 1, 1], [], []>} : vector<8x36xbf16>, vector<36x256xbf16>, vector<8x256xf32> -> vector<8x256xf32>
    %c0_5 = arith.constant 0 : index
    %c0_6 = arith.constant 0 : index
    %7 = vector.load %arg4[%c0_5, %c0_6] : memref<8x1xf32, #tpu.memory_space<vmem>>, vector<8x1xf32>
    %8 = vector.broadcast %7 : vector<8x1xf32> to vector<8x256xf32>
    %9 = arith.addf %6, %8 : vector<8x256xf32>
    %cst_7 = arith.constant 0.000000e+00 : f32
    %10 = vector.broadcast %cst_7 : f32 to vector<8x256xf32>
    %11 = arith.maximumf %9, %10 : vector<8x256xf32>
    %c0_8 = arith.constant 0 : index
    %c0_9 = arith.constant 0 : index
    %12 = vector.load %arg8[%c0_8, %c0_9] : memref<8x1xf32, #tpu.memory_space<vmem>>, vector<8x1xf32>
    %cst_10 = arith.constant dense<0.000000e+00> : vector<8xf32>
    %13 = vector.multi_reduction <add>, %11, %cst_10 [1] : vector<8x256xf32> to vector<8xf32>
    %14 = vector.shape_cast %13 : vector<8xf32> to vector<8x1xf32>
    %15 = arith.addf %12, %14 : vector<8x1xf32>
    %c0_11 = arith.constant 0 : index
    %c0_12 = arith.constant 0 : index
    %16 = vector.load %arg8[%c0_11, %c0_12] : memref<8x1xf32, #tpu.memory_space<vmem>>, vector<8x1xf32>
    tpu.vector_store %arg8[%c0_11, %c0_12], %15 {strides = array<i32>} : memref<8x1xf32, #tpu.memory_space<vmem>>, vector<8x1xf32>,
    %c256_i32 = arith.constant 256 : i32
    %17 = arith.muli %arg1, %c256_i32 : i32
    %18 = tpu.assume_multiple %17, 256 : i32
    %c0_13 = arith.constant 0 : index
    %c0_14 = arith.constant 0 : index
    %19 = arith.index_cast %18 : i32 to index
    %20 = vector.load %arg7[%c0_13, %c0_14, %19] : memref<1x8x256xf32, #tpu.memory_space<vmem>>, vector<1x8x256xf32>
    %21 = vector.shape_cast %20 : vector<1x8x256xf32> to vector<8x256xf32>
    %22 = vector.shape_cast %11 : vector<8x256xf32> to vector<1x8x256xf32>
    tpu.vector_store %arg7[%c0_13, %c0_14, %19], %22 {strides = array<i32>} : memref<1x8x256xf32, #tpu.memory_space<vmem>>, vector<1x8x256xf32>,
    %c0_i32_15 = arith.constant 0 : i32
    %23 = arith.cmpi eq, %arg1, %c0_i32_15 : i32
    %24 = arith.extui %23 : i1 to i32
    %c0_i32_16 = arith.constant 0 : i32
    %25 = arith.cmpi ne, %24, %c0_i32_16 : i32
    scf.if %25 {
      %c0_17 = arith.constant 0 : index
      %c0_18 = arith.constant 0 : index
      %26 = vector.load %arg8[%c0_17, %c0_18] : memref<8x1xf32, #tpu.memory_space<vmem>>, vector<8x1xf32>
      %cst_19 = arith.constant 3.906250e-03 : f32
      %27 = vector.broadcast %cst_19 : f32 to vector<8x1xf32>
      %28 = arith.mulf %26, %27 : vector<8x1xf32>
      %c0_20 = arith.constant 0 : index
      %c0_21 = arith.constant 0 : index
      %29 = vector.load %arg5[%c0_20, %c0_21] : memref<8x8xf32, #tpu.memory_space<vmem>>, vector<8x8xf32>
      %30 = vector.broadcast %28 : vector<8x1xf32> to vector<8x8xf32>
      %31 = arith.mulf %29, %30 : vector<8x8xf32>
      %cst_22 = arith.constant dense<0.000000e+00> : vector<8xf32>
      %32 = vector.multi_reduction <add>, %31, %cst_22 [0] : vector<8x8xf32> to vector<8xf32>
      %33 = vector.shape_cast %32 : vector<8xf32> to vector<1x8xf32>
      %c0_23 = arith.constant 0 : index
      %c0_24 = arith.constant 0 : index
      %34 = vector.load %arg6[%c0_23, %c0_24] : memref<1x1xf32, #tpu.memory_space<vmem>>, vector<1x1xf32>
      %35 = vector.broadcast %34 : vector<1x1xf32> to vector<1x8xf32>
      %36 = arith.addf %33, %35 : vector<1x8xf32>
      %37 = arith.negf %36 : vector<1x8xf32>
      %38 = math.exp %37 : vector<1x8xf32>
      %cst_25 = arith.constant 1.000000e+00 : f32
      %39 = vector.broadcast %cst_25 : f32 to vector<1x8xf32>
      %40 = arith.addf %39, %38 : vector<1x8xf32>
      %41 = arith.divf %39, %40 : vector<1x8xf32>
      %42 = tpu.iota {dimensions = array<i32: 0>} : vector<8x8xi32>
      %43 = tpu.iota {dimensions = array<i32: 1>} : vector<8x8xi32>
      %44 = arith.cmpi eq, %42, %43 : vector<8x8xi32>
      %cst_26 = arith.constant 0.000000e+00 : f32
      %45 = vector.shape_cast %41 : vector<1x8xf32> to vector<1x8xf32>
      %46 = vector.broadcast %45 : vector<1x8xf32> to vector<8x8xf32>
      %47 = vector.broadcast %cst_26 : f32 to vector<8x8xf32>
      %48 = arith.select %44, %46, %47 : vector<8x8xi1>, vector<8x8xf32>
      %cst_27 = arith.constant dense<0.000000e+00> : vector<8xf32>
      %49 = vector.multi_reduction <add>, %48, %cst_27 [1] : vector<8x8xf32> to vector<8xf32>
      %50 = vector.shape_cast %49 : vector<8xf32> to vector<8x1xf32>
      %c0_28 = arith.constant 0 : index
      %c0_29 = arith.constant 0 : index
      %c0_30 = arith.constant 0 : index
      %51 = vector.load %arg7[%c0_28, %c0_29, %c0_30] : memref<1x8x256xf32, #tpu.memory_space<vmem>>, vector<1x8x256xf32>
      %52 = vector.shape_cast %51 : vector<1x8x256xf32> to vector<8x256xf32>
      %53 = vector.broadcast %50 : vector<8x1xf32> to vector<8x256xf32>
      %54 = arith.mulf %52, %53 : vector<8x256xf32>
      %c0_31 = arith.constant 0 : index
      %c0_32 = arith.constant 0 : index
      %c0_33 = arith.constant 0 : index
      %55 = vector.load %arg7[%c0_31, %c0_32, %c0_33] : memref<1x8x256xf32, #tpu.memory_space<vmem>>, vector<1x8x256xf32>
      %56 = vector.shape_cast %55 : vector<1x8x256xf32> to vector<8x256xf32>
      %57 = vector.shape_cast %54 : vector<8x256xf32> to vector<1x8x256xf32>
      tpu.vector_store %arg7[%c0_31, %c0_32, %c0_33], %57 {strides = array<i32>} : memref<1x8x256xf32, #tpu.memory_space<vmem>>, vector<1x8x256xf32>,
    } else {
    }
    return
  }
  func.func @transform_0(%arg0: i32, %arg1: i32) -> (i32, i32, i32) {
    %c0_i32 = arith.constant 0 : i32
    %c0_i32_0 = arith.constant 0 : i32
    return %arg0, %c0_i32, %arg1 : i32, i32, i32
  }
  func.func @transform_1(%arg0: i32, %arg1: i32) -> (i32, i32) {
    %c0_i32 = arith.constant 0 : i32
    %c0_i32_0 = arith.constant 0 : i32
    %c0_i32_1 = arith.constant 0 : i32
    return %c0_i32, %c0_i32_0 : i32, i32
  }
  func.func @transform_2(%arg0: i32, %arg1: i32) -> (i32, i32) {
    %c0_i32 = arith.constant 0 : i32
    %c0_i32_0 = arith.constant 0 : i32
    %c0_i32_1 = arith.constant 0 : i32
    return %c0_i32, %c0_i32_0 : i32, i32
  }
  func.func @transform_3(%arg0: i32, %arg1: i32) -> (i32, i32) {
    %c0_i32 = arith.constant 0 : i32
    %c0_i32_0 = arith.constant 0 : i32
    %c0_i32_1 = arith.constant 0 : i32
    return %c0_i32, %c0_i32_0 : i32, i32
  }
  func.func @transform_4(%arg0: i32, %arg1: i32) -> (i32, i32) {
    %c0_i32 = arith.constant 0 : i32
    %c0_i32_0 = arith.constant 0 : i32
    %c0_i32_1 = arith.constant 0 : i32
    return %c0_i32, %c0_i32_0 : i32, i32
  }
  func.func @transform_5(%arg0: i32, %arg1: i32) -> (i32, i32, i32) {
    %c0_i32 = arith.constant 0 : i32
    %c0_i32_0 = arith.constant 0 : i32
    %c0_i32_1 = arith.constant 0 : i32
    return %arg0, %c0_i32, %c0_i32_0 : i32, i32, i32
  }
}

</mosaic_0001>

<llo_original>
// kernel: tpu_custom_call.1
$region0: #{tpu_custom_call.1}
  #allocation0 [shape = 'u32[]', space=smem, size = 0x4, offset = 0x4, fixed_abs, tag = 'smem constant byte address 0x4 - core index']
  #allocation1 [shape = 'u32[144,128]{1,0:T(1,128)}', space=vmem, size = 0x12000, scoped, tag = 'internal scratch']
  #allocation2 [shape = 'f32[8,1]{1,0:T(8,128)}', space=vmem, size = 0x1000, scoped, tag = 'scratch operand']
  #allocation3 [shape = 'f32[1,1]{1,0:T(1,128)S(1)}', space=vmem, size = 0x200, scoped, tag = 'scoped memory for tpu_custom_call.1']
  %s0 = inlined_call_operand.vmem [shape: bf16[2,36,256], index: 0, kind: input, shape index: {}]
  %s1 = inlined_call_operand.vmem [shape: bf16[8,36], index: 1, kind: input, shape index: {}]
  %s2 = inlined_call_operand.vmem [shape: f32[8,1], index: 2, kind: input, shape index: {}]
  %s3 = inlined_call_operand.vmem [shape: f32[8,8], index: 3, kind: input, shape index: {}]
  %s4 = inlined_call_operand.<no memory space> [shape: f32[1,1], index: 4, kind: input, shape index: {}]
  %s5 = inlined_call_operand.hbm [shape: f32[2,8,256], index: 5, kind: output, shape index: {}]
  %s6 = sld [smem:[#allocation0]]
  $region61: #{tpu_custom_call.1} parent=0
    _
  %s8 = ssub.s32 1, %s6
  %s9 = scalar_select 0, %s8, %s6
  %v10 = vstv %s4
  %11 = vst [vmem:[#allocation3] sm:$0x1] %v10
  $region1: #{tpu_custom_call.1} parent=0
    #allocation4 [shape = 'u8[16384]{0}', space=vmem, size = 0x4000, scoped, tag = 'output window, operand 0']
    #allocation5 [shape = 's32[2]{0}', space=sflag, size = 0x8, scoped, tag = 'scoped memory for tpu_custom_call.1']
    %12 = vsyncpa [#allocation5], 0
    %s13 = scalar_lea.sflag [#allocation5], 1
    %14 = vsyncpa %s13, 0
    loop: start=0, step=1, limit=4
    $region2: #{tpu_custom_call.1} parent=1 // loop_pre_header
      _
    $region3: #{tpu_custom_call.1} parent=1 // loop_header
      %s16 = sphi 0, %s20
      %p17 = scmp.ge.s32.totalorder %s16, 4
      %s23 = sphi 0, %s35
      %s24 = sphi 0, %s31
      %s25 = sphi 0, %s23
      %s26 = sphi 0, %s24
      %s27 = sphi 0, %s25
      %s28 = sphi 0, %s26
      %s40 = sphi 0, %s42
      %s43 = sphi 0, %s40
      %s44 = sphi 0, %s43
      %s60 = sphi 0, %s44
      %s64 = sphi 0, %s64
      %s66 = sphi 0, %s64
      %s67 = sphi 0, %s66
      %s81 = sphi 0, %s67
      %s85 = sphi 0, %s85
      %s87 = sphi 0, %s85
      %s88 = sphi 0, %s87
      %s102 = sphi 0, %s88
      %s106 = sphi 0, %s106
      %s108 = sphi 0, %s106
      %s109 = sphi 0, %s108
      %s123 = sphi 0, %s109
      %s127 = sphi 0, %s127
      %s129 = sphi 0, %s127
      %s130 = sphi 0, %s129
      %s144 = sphi 0, %s130
      %s150 = sphi 0, %s152
      %s153 = sphi 0, %s150
      %s154 = sphi 0, %s153
      %s170 = sphi 0, %s154
    $region4: #{tpu_custom_call.1} parent=1 // loop_header_branch
      %19 = sbr.rel (%p17) target = $region8
    $region5: #{tpu_custom_call.1} parent=1 // loop_body
      %s21 = ssub.s32 %s16, 1
      %s22 = ssub.s32 %s16, 2
      %s29 = sadd.s32 1, %s24
      %p30 = scmp.ge.s32.totalorder %s29, 1
      %s31 = scalar_select %p30, 0, %s29
      %s32 = sadd.s32 1, %s23
      %s33 = scalar_select %p30, %s32, %s23
      %p34 = scmp.ge.s32.totalorder %s33, 2
      %s35 = scalar_select %p34, 0, %s33
      %s36 = ssub.s32 %s23, %s35
      %s37 = ssub.s32 %s24, %s31
      %s38 = sor.u32 %s36, %s37
      %p39 = scmp.eq.s32.totalorder %s38, 0
      %s41 = sadd.s32 %s40, 1
      %s42 = scalar_select %p39, %s40, %s41
      %p45 = pneg %p39
      %p46 = scmp.eq.s32.totalorder %s16, 1
      %p47 = por %p45, %p46
      %p48 = scmp.ne.s32.totalorder %s40, %s43
      %p49 = scmp.eq.s32.totalorder %s16, 0
      %p50 = por %p48, %p49
      %p51 = scmp.ne.s32.totalorder %s40, %s43
      %p52 = scmp.eq.s32.totalorder %s21, 1
      %p53 = por %p51, %p52
      %p54 = scmp.ne.s32.totalorder %s43, %s44
      %p55 = scmp.eq.s32.totalorder %s21, 0
      %p56 = por %p54, %p55
      %p57 = scmp.ne.s32.totalorder %s43, %s44
      %p58 = scmp.eq.s32.totalorder %s22, 1
      %p59 = por %p57, %p58
      %p61 = scmp.ne.s32.totalorder %s44, %s60
      %p62 = scmp.eq.s32.totalorder %s22, 0
      %p63 = por %p61, %p62
      %s65 = sadd.s32 %s64, 1
      %p68 = scmp.eq.s32.totalorder %s16, 1
      %p69 = scmp.ne.s32.totalorder %s64, %s66
      %p70 = scmp.eq.s32.totalorder %s16, 0
      %p71 = por %p69, %p70
      %p72 = scmp.ne.s32.totalorder %s64, %s66
      %p73 = scmp.eq.s32.totalorder %s21, 1
      %p74 = por %p72, %p73
      %p75 = scmp.ne.s32.totalorder %s66, %s67
      %p76 = scmp.eq.s32.totalorder %s21, 0
      %p77 = por %p75, %p76
      %p78 = scmp.ne.s32.totalorder %s66, %s67
      %p79 = scmp.eq.s32.totalorder %s22, 1
      %p80 = por %p78, %p79
      %p82 = scmp.ne.s32.totalorder %s67, %s81
      %p83 = scmp.eq.s32.totalorder %s22, 0
      %p84 = por %p82, %p83
      %s86 = sadd.s32 %s85, 1
      %p89 = scmp.eq.s32.totalorder %s16, 1
      %p90 = scmp.ne.s32.totalorder %s85, %s87
      %p91 = scmp.eq.s32.totalorder %s16, 0
      %p92 = por %p90, %p91
      %p93 = scmp.ne.s32.totalorder %s85, %s87
      %p94 = scmp.eq.s32.totalorder %s21, 1
      %p95 = por %p93, %p94
      %p96 = scmp.ne.s32.totalorder %s87, %s88
      %p97 = scmp.eq.s32.totalorder %s21, 0
      %p98 = por %p96, %p97
      %p99 = scmp.ne.s32.totalorder %s87, %s88
      %p100 = scmp.eq.s32.totalorder %s22, 1
      %p101 = por %p99, %p100
      %p103 = scmp.ne.s32.totalorder %s88, %s102
      %p104 = scmp.eq.s32.totalorder %s22, 0
      %p105 = por %p103, %p104
      %s107 = sadd.s32 %s106, 1
      %p110 = scmp.eq.s32.totalorder %s16, 1
      %p111 = scmp.ne.s32.totalorder %s106, %s108
      %p112 = scmp.eq.s32.totalorder %s16, 0
      %p113 = por %p111, %p112
      %p114 = scmp.ne.s32.totalorder %s106, %s108
      %p115 = scmp.eq.s32.totalorder %s21, 1
      %p116 = por %p114, %p115
      %p117 = scmp.ne.s32.totalorder %s108, %s109
      %p118 = scmp.eq.s32.totalorder %s21, 0
      %p119 = por %p117, %p118
      %p120 = scmp.ne.s32.totalorder %s108, %s109
      %p121 = scmp.eq.s32.totalorder %s22, 1
      %p122 = por %p120, %p121
      %p124 = scmp.ne.s32.totalorder %s109, %s123
      %p125 = scmp.eq.s32.totalorder %s22, 0
      %p126 = por %p124, %p125
      %s128 = sadd.s32 %s127, 1
      %p131 = scmp.eq.s32.totalorder %s16, 1
      %p132 = scmp.ne.s32.totalorder %s127, %s129
      %p133 = scmp.eq.s32.totalorder %s16, 0
      %p134 = por %p132, %p133
      %p135 = scmp.ne.s32.totalorder %s127, %s129
      %p136 = scmp.eq.s32.totalorder %s21, 1
      %p137 = por %p135, %p136
      %p138 = scmp.ne.s32.totalorder %s129, %s130
      %p139 = scmp.eq.s32.totalorder %s21, 0
      %p140 = por %p138, %p139
      %p141 = scmp.ne.s32.totalorder %s129, %s130
      %p142 = scmp.eq.s32.totalorder %s22, 1
      %p143 = por %p141, %p142
      %p145 = scmp.ne.s32.totalorder %s130, %s144
      %p146 = scmp.eq.s32.totalorder %s22, 0
      %p147 = por %p145, %p146
      %s148 = ssub.s32 %s23, %s35
      %p149 = scmp.eq.s32.totalorder %s148, 0
      %s151 = sadd.s32 %s150, 1
      %s152 = scalar_select %p149, %s150, %s151
      %p155 = pneg %p149
      %p156 = scmp.eq.s32.totalorder %s16, 1
      %p157 = por %p155, %p156
      %p158 = scmp.ne.s32.totalorder %s150, %s153
      %p159 = scmp.eq.s32.totalorder %s16, 0
      %p160 = por %p158, %p159
      %p161 = scmp.ne.s32.totalorder %s150, %s153
      %p162 = scmp.eq.s32.totalorder %s21, 1
      %p163 = por %p161, %p162
      %p164 = scmp.ne.s32.totalorder %s153, %s154
      %p165 = scmp.eq.s32.totalorder %s21, 0
      %p166 = por %p164, %p165
      %p167 = scmp.ne.s32.totalorder %s153, %s154
      %p168 = scmp.eq.s32.totalorder %s22, 1
      %p169 = por %p167, %p168
      %p171 = scmp.ne.s32.totalorder %s154, %s170
      %p172 = scmp.eq.s32.totalorder %s22, 0
      %p173 = por %p171, %p172
      %p174 = scmp.le.s32.totalorder 1, %s16
      %p175 = scmp.lt.s32.totalorder %s16, 3
      %p176 = pnand %p174, %p175
      %p177 = pneg %p176
      // Predicated region
      $region9: #{tpu_custom_call.1} parent=5 // pred_check
        _
      $region10: #{tpu_custom_call.1} parent=5 // pred_check_branch
        %179 = sbr.rel (%p176) target = $region12
      $region11: #{tpu_custom_call.1} parent=5 // pred_region
        %s180 = ssub.s32 %s16, 1
        // Predicated region
        $region13: #{tpu_custom_call.1} parent=11 // pred_check
          %p181 = pneg %p77
        $region14: #{tpu_custom_call.1} parent=11 // pred_check_branch
          %183 = sbr.rel (%p181) target = $region16
        $region15: #{tpu_custom_call.1} parent=11 // pred_region
          _
        $region16: #{tpu_custom_call.1} parent=11 // pred_fallthru
          _
        // Predicated region
        $region17: #{tpu_custom_call.1} parent=11 // pred_check
          %p184 = pneg %p98
        $region18: #{tpu_custom_call.1} parent=11 // pred_check_branch
          %186 = sbr.rel (%p184) target = $region20
        $region19: #{tpu_custom_call.1} parent=11 // pred_region
          _
        $region20: #{tpu_custom_call.1} parent=11 // pred_fallthru
          _
        // Predicated region
        $region21: #{tpu_custom_call.1} parent=11 // pred_check
          %p187 = pneg %p119
        $region22: #{tpu_custom_call.1} parent=11 // pred_check_branch
          %189 = sbr.rel (%p187) target = $region24
        $region23: #{tpu_custom_call.1} parent=11 // pred_region
          _
        $region24: #{tpu_custom_call.1} parent=11 // pred_fallthru
          _
        // Predicated region
        $region25: #{tpu_custom_call.1} parent=11 // pred_check
          %p190 = pneg %p140
        $region26: #{tpu_custom_call.1} parent=11 // pred_check_branch
          %192 = sbr.rel (%p190) target = $region28
        $region27: #{tpu_custom_call.1} parent=11 // pred_region
          _
        $region28: #{tpu_custom_call.1} parent=11 // pred_fallthru
          _
      $region12: #{tpu_custom_call.1} parent=5 // pred_fallthru
        _
      %p193 = scmp.lt.s32.totalorder %s16, 2
      // Predicated region
      $region29: #{tpu_custom_call.1} parent=5 // pred_check
        %p194 = pneg %p193
      $region30: #{tpu_custom_call.1} parent=5 // pred_check_branch
        %196 = sbr.rel (%p194) target = $region32
      $region31: #{tpu_custom_call.1} parent=5 // pred_region
        // Predicated region
        $region33: #{tpu_custom_call.1} parent=31 // pred_check
          %p197 = pneg %p50
        $region34: #{tpu_custom_call.1} parent=31 // pred_check_branch
          %199 = sbr.rel (%p197) target = $region36
        $region35: #{tpu_custom_call.1} parent=31 // pred_region
          %s200 = smul.u32 2, %s24
          %p201 = scmp.lt.s32.totalorder %s23, 1
          %s202 = scalar_select %p201, %s23, 1
          %p203 = scmp.lt.s32.totalorder %s200, 1
          %s204 = scalar_select %p203, %s200, 1
          %s205 = smul.addr %s202, 10
          %s206 = sadd.s32 %s204, %s205
          %s207 = smul.addr %s206, 4
          %s208 = scalar_lea.vmem %s0, %s207
          %s209 = smul.u32 2, %s24
        $region36: #{tpu_custom_call.1} parent=31 // pred_fallthru
          _
      $region32: #{tpu_custom_call.1} parent=5 // pred_fallthru
        _
      %p210 = scmp.le.s32.totalorder 1, %s16
      %p211 = scmp.lt.s32.totalorder %s16, 3
      %p212 = pnand %p210, %p211
      %p213 = pneg %p212
      // Predicated region
      $region37: #{tpu_custom_call.1} parent=5 // pred_check
        _
      $region38: #{tpu_custom_call.1} parent=5 // pred_check_branch
        %215 = sbr.rel (%p212) target = $region40
      $region39: #{tpu_custom_call.1} parent=5 // pred_region
        %s216 = ssub.s32 %s16, 1
        %s217 = smul.u32 2, %s26
        %p218 = scmp.lt.s32.totalorder %s25, 1
        %s219 = scalar_select %p218, %s25, 1
        %p220 = scmp.lt.s32.totalorder %s217, 1
        %s221 = scalar_select %p220, %s217, 1
        %s222 = smul.addr %s219, 10
        %s223 = sadd.s32 %s221, %s222
        %s224 = smul.addr %s223, 4
        %s225 = scalar_lea.vmem %s0, %s224
        %p226 = pneg %p56
        %p227 = pneg %p53
        %p228 = pneg %p77
        %p229 = pneg %p74
        %p230 = pneg %p98
        %p231 = pneg %p95
        %p232 = pneg %p119
        %p233 = pneg %p116
        %p234 = pneg %p140
        %p235 = pneg %p137
        %p236 = pneg %p166
        %p237 = pneg %p163
        %s238 = sand.u32 %s153, 1
        %s239 = scalar_lea.sflag [#allocation5], %s238
        %s240 = sand.u32 %s153, 1
        %s241 = smul.addr %s240, 16
        %s242 = scalar_lea.vmem [#allocation4], %s241
        %s243 = smul.u32 2, %s26
        %p244 = scmp.lt.s32.totalorder %s25, 1
        %s245 = scalar_select %p244, %s25, 1
        %p246 = scmp.lt.s32.totalorder %s243, 1
        %s247 = scalar_select %p246, %s243, 1
        %s248 = smul.addr %s245, 10
        %s249 = sadd.s32 %s247, %s248
        %s250 = smul.addr %s249, 4
        %s251 = scalar_lea.vmem %s0, %s250
        %s252 = smul.u32 2, %s26
        %p254 = scmp.eq.s32.totalorder %s26, 0
        // Predicated region
        $region41: #{tpu_custom_call.1} parent=39 // pred_check
          %p255 = pneg %p254
        $region42: #{tpu_custom_call.1} parent=39 // pred_check_branch
          %257 = sbr.rel (%p255) target = $region44
        $region43: #{tpu_custom_call.1} parent=39 // pred_region
          %vm258 = vcmask 7168
          %259 = vst.msk [vmem:[#allocation2] sm:$0xff] %vm258, 0.0
        $region44: #{tpu_custom_call.1} parent=39 // pred_fallthru
          _
        %v260 = vld [vmem:[%s1] sm:$0xf]
        %v261 = vld [vmem:[%s251] sm:$0xff]
        %v262 = vld [vmem:[%s251 + $0x8] sm:$0xff]
        %v263 = vld [vmem:[%s251 + $0x10] sm:$0xff]
        %v264 = vld [vmem:[%s251 + $0x18] sm:$0xff]
        %v265 = vld [vmem:[%s251 + $0x20] sm:$0x33]
        %v266 = vld [vmem:[%s2] sm:$0xff]
        %268 = vset.pattern.permute.xlu0 0
        %269 = vperm.xlu0 %268, %v266
        %v270 = vpop.permute.xlu0 %269
        %v277 = vunpack.c.l.b16 %v261
        %v278 = vunpack.c.h.b16 %v261
        %v279 = vunpack.c.l.b16 %v262
        %v280 = vunpack.c.h.b16 %v262
        %v281 = vunpack.c.l.b16 %v263
        %v282 = vunpack.c.h.b16 %v263
        %v283 = vunpack.c.l.b16 %v264
        %v284 = vunpack.c.h.b16 %v264
        %v285 = vunpack.c.l.b16 %v265
        %v286 = vunpack.c.h.b16 %v265
        %v287 = vpack.c.b16 %v279, %v277
        %v288 = vpack.c.b16 %v280, %v278
        %v289 = vpack.c.b16 %v283, %v281
        %v290 = vpack.c.b16 %v284, %v282
        %v291 = vpack.c.b16 %v285, %v285
        %v292 = vpack.c.b16 %v286, %v286
        %vm297 = vcmask 293888
        %v299 = vsel %vm297, %v260, 0
        %vm301 = vcmask 1041408
        %v303 = vsel %vm301, %v291, 0
        %v306 = vsel %vm301, %v292, 0
        %308 = vmatprep.subr.bf16.mxu0 %v288
        %309 = vmatpush1.bf16.msra.mxu0 %v287
        %310 = vmatprep.subr.bf16.mxu0 %v290
        %311 = vmatpush1.bf16.msra.mxu0 %v289
        %312 = vmatprep.subr.bf16.mxu0 %v306
        %313 = vmatpush1.bf16.msra.mxu0 %v303
        %314 = vmatprep.subr.bf16.mxu0 0
        %315 = vmatpush1.bf16.msra.mxu0 0
        %316 = vmatprep.subr.bf16.mxu0 0
        %317 = vmatpush1.bf16.msra.mxu0 0
        %318 = vmatprep.subr.bf16.mxu0 0
        %319 = vmatpush1.bf16.msra.mxu0 0
        %320 = vmatprep.subr.bf16.mxu0 0
        %321 = vmatpush1.bf16.msra.mxu0 0
        %322 = vmatprep.subr.bf16.mxu0 0
        %323 = vmatpush1.bf16.msra.mxu0 0
        %324 = vmatprep.subr.bf16.mxu0 0
        %325 = vmatpush1.bf16.msra.mxu0 0
        %326 = vmatprep.subr.bf16.mxu0 0
        %327 = vmatpush1.bf16.msra.mxu0 0
        %328 = vmatprep.subr.bf16.mxu0 0
        %329 = vmatpush1.bf16.msra.mxu0 0
        %330 = vmatprep.subr.bf16.mxu0 0
        %331 = vmatpush1.bf16.msra.mxu0 0
        %332 = vmatprep.subr.bf16.mxu0 0
        %333 = vmatpush1.bf16.msra.mxu0 0
        %334 = vmatprep.subr.bf16.mxu0 0
        %335 = vmatpush1.bf16.msra.mxu0 0
        %336 = vmatprep.subr.bf16.mxu0 0
        %337 = vmatpush1.bf16.msra.mxu0 0
        %338 = vmatprep.subr.bf16.mxu0 0
        %339 = vmatpush1.bf16.msra.mxu0 0
        %340 = vmatprep.mubr.bf16.mxu0 0
        %341 = vmatmul.mubr.bf16.gmra.mrb[0].mxu0 %v299
        %v342 = vpop.f32.mrb[0].mxu0
        %v343 = vadd.f32 %v270, %v342
        %v344 = vpop.f32.mrb[0].mxu0
        %v345 = vadd.f32 %v270, %v344
        %v346 = vpop.f32.mrb[0].mxu0
        %v347 = vpop.f32.mrb[0].mxu0
        %348 = vdwg.mxu0
        %v349 = vmax.f32 %v343, 0.0
        %v350 = vmax.f32 %v345, 0.0
        %v351 = vld [vmem:[#allocation2] sm:$0xff]
        %v352 = vadd.f32 %v349, %v350
        %353 = vadd.xlane.f32.xlu0 %v352
        %v354 = vpop.xlane.xlu0 %353
        %v355 = vadd.f32 %v351, %v354
        %vm356 = vcmask 7168
        %357 = vst.msk [vmem:[#allocation2] sm:$0xff] %vm356, %v355
        %s358 = smul.u32 %s26, 256
        %s359 = sshra.s32 %s358, 7
        %s360 = sand.u32 %s358, 127
        %s361 = smul.addr %s359, 8
        %s362 = scalar_lea.vmem %s242, %s361 [#allocation4]
        %363 = vst [vmem:[%s362] sm:$0xff] %v349
        %364 = vst [vmem:[%s362 + $0x8] sm:$0xff] %v350
        // Predicated region
        $region45: #{tpu_custom_call.1} parent=39 // pred_check
          %p365 = pneg %p254
        $region46: #{tpu_custom_call.1} parent=39 // pred_check_branch
          %367 = sbr.rel (%p365) target = $region48
        $region47: #{tpu_custom_call.1} parent=39 // pred_region
          %v368 = vld [vmem:[#allocation2] sm:$0xff]
          %v369 = vmul.f32 %v368, 0.00390625
          %v370 = vld [vmem:[%s3] sm:$0xff]
          %372 = vset.pattern.permute.xlu0 0
          %373 = vperm.xlu0 %372, %v369
          %v374 = vpop.permute.xlu0 %373
          %v376 = vmul.f32 %v370, %v374
          %vm377 = vcmask 64512
          %v378 = vsel %vm377, %v376, 0.0
          %v379 = vrot.slane %v378, 4
          %v380 = vadd.f32 %v378, %v379
          %v381 = vrot.slane %v380, 2
          %v382 = vadd.f32 %v380, %v381
          %v383 = vrot.slane %v382, 1
          %v384 = vadd.f32 %v382, %v383
          %v385 = vld [vmem:[#allocation3] sm:$0x1]
          %387 = vset.pattern.permute.xlu0 0
          %388 = vperm.xlu0 %387, %v385
          %v389 = vpop.permute.xlu0 %388
          %v391 = vlaneseq
          %v392 = vshrl.u32 %v391, 7
          %v393 = vsub.s32 0, %v392
          %v394 = vrot.slane %v389, %v393
          %v395 = vadd.f32 %v384, %v394
          %v396 = vxor.u32 %v395, 2147483648
          %v397 = vmul.f32 %v396, 1.442695
          %v398 = vpow.pop %v397
          %v399 = vadd.f32 %v398, 1.0
          %v400 = vrcp.pop %v399
          %v401 = vmul.f32 1.0, %v400
          %v402 = vlaneseq
          %v403 = vshrl.u32 %v402, 7
          %v404 = vlaneseq
          %v405 = vand.u32 %v404, 127
          %vm406 = vcmp.eq.s32.totalorder %v403, %v405
          %v407 = vsel %vm406, %v401, 0.0
          %v408 = vsel %vm377, %v407, 0.0
          %409 = vadd.xlane.f32.xlu0 %v408
          %v410 = vpop.xlane.xlu0 %409
          %v411 = vld [vmem:[%s242] sm:$0xff]
          %v412 = vld [vmem:[%s242 + $0x8] sm:$0xff]
          %v413 = vmul.f32 %v411, %v410
          %v414 = vmul.f32 %v412, %v410
          %415 = vst [vmem:[%s242] sm:$0xff] %v413
          %416 = vst [vmem:[%s242 + $0x8] sm:$0xff] %v414
        $region48: #{tpu_custom_call.1} parent=39 // pred_fallthru
          _
        %s417 = sand.u32 %s153, 1
        %s418 = scalar_lea.sflag [#allocation5], %s417
        %s419 = sand.u32 %s153, 1
        %s420 = smul.addr %s419, 16
        %s421 = scalar_lea.vmem [#allocation4], %s420
        // Predicated region
        $region49: #{tpu_custom_call.1} parent=39 // pred_check
          %p422 = pneg %p163
        $region50: #{tpu_custom_call.1} parent=39 // pred_check_branch
          %424 = sbr.rel (%p422) target = $region52
        $region51: #{tpu_custom_call.1} parent=39 // pred_region
          %s426 = ssub.s32 256, 256
          %427 = vsyncadd %s418, %s426
          %s428 = smul.addr %s25, 2
          %s429 = smul.addr %s428, 128
          %s430 = scalar_lea.hbm %s5, %s429
          %s432 = sshll.u32 %s421, 4
          %s433 = int_to_ptr.vmem [resolvable:$true] %s432
          %435 = dma.vmem_to_hbm [thread:$0]  %s433, 256, %s430, %s418
        $region52: #{tpu_custom_call.1} parent=39 // pred_fallthru
          _
      $region40: #{tpu_custom_call.1} parent=5 // pred_fallthru
        _
      %p436 = scmp.le.s32.totalorder 2, %s16
      // Predicated region
      $region53: #{tpu_custom_call.1} parent=5 // pred_check
        %p437 = pneg %p436
      $region54: #{tpu_custom_call.1} parent=5 // pred_check_branch
        %439 = sbr.rel (%p437) target = $region56
      $region55: #{tpu_custom_call.1} parent=5 // pred_region
        %s440 = ssub.s32 %s16, 2
        // Predicated region
        $region57: #{tpu_custom_call.1} parent=55 // pred_check
          %p441 = pneg %p169
        $region58: #{tpu_custom_call.1} parent=55 // pred_check_branch
          %443 = sbr.rel (%p441) target = $region60
        $region59: #{tpu_custom_call.1} parent=55 // pred_region
          %s444 = sand.u32 %s154, 1
          %s445 = scalar_lea.sflag [#allocation5], %s444
          %s446 = sand.u32 %s154, 1
          %s447 = smul.addr %s446, 16
          %s448 = scalar_lea.vmem [#allocation4], %s447
          %449 = dma.done %s445, 256
        $region60: #{tpu_custom_call.1} parent=55 // pred_fallthru
          _
      $region56: #{tpu_custom_call.1} parent=5 // pred_fallthru
        _
    $region6: #{tpu_custom_call.1} parent=1 // loop_footer
      %s20 = sadd.s32 1, %s16
    $region7: #{tpu_custom_call.1} parent=1 // loop_footer_branch
      %15 = sbr.rel target = $region3
    $region8: #{tpu_custom_call.1} parent=1 // loop_exit
      _
    %450 = vsyncpa [#allocation5], 1
    %s451 = scalar_lea.sflag [#allocation5], 1
    %452 = vsyncpa %s451, 1

</llo_original>
